<compile_context>
chip_gen: v6e
topology: v6e:2x2x1
jax: 0.10.0
libtpu: 0.0.40
codegen_flags: <defaults>
</compile_context>

<pallas_src>
import jax
import jax.numpy as jnp
from jax.experimental import pallas as pl
from jax.experimental.pallas import tpu as pltpu

_LANE = 128


def _round_up(x, m):
    return ((x + m - 1) // m) * m


def _mlp_kernel(obs_ref, msg_ref, fp_ref,
                w1o_ref, w1m_ref, w1f_ref, b1_ref,
                w2_ref, b2_ref, w3_ref, b3_ref, o_ref):
    def _contrib(v_ref, w_ref):
        v = v_ref[...]
        w = w_ref[...]
        if v.shape[1] == 1:
            # Rank-1 contribution (comm/fingerprint dim == 1): cheap VPU
            # broadcast-multiply instead of a degenerate K=1 MXU matmul.
            return v * w.astype(jnp.float32)
        return jnp.dot(v.astype(jnp.bfloat16), w,
                       preferred_element_type=jnp.float32)

    # Layer 1: fused concat -> split matmuls (bf16 MXU operands, f32 accumulate).
    h1 = jnp.dot(obs_ref[...].astype(jnp.bfloat16), w1o_ref[...],
                 preferred_element_type=jnp.float32)
    h1 = h1 + _contrib(msg_ref, w1m_ref)
    h1 = h1 + _contrib(fp_ref, w1f_ref)
    h1 = jnp.maximum(h1 + b1_ref[...], 0.0)           # f32 elementwise (VPU)

    # Layer 2: Linear(Hp -> Hp) + ReLU.
    h2 = jnp.dot(h1.astype(jnp.bfloat16), w2_ref[...],
                 preferred_element_type=jnp.float32) + b2_ref[...]
    h2 = jnp.maximum(h2, 0.0)

    # Layer 3: Linear(Hp -> act_dim), unpadded narrow output (masked vst is
    # hidden by the compute/DMA slack; HBM writeback is 32x smaller).
    out = jnp.dot(h2.astype(jnp.bfloat16), w3_ref[...],
                  preferred_element_type=jnp.float32) + b3_ref[...]
    o_ref[...] = out.astype(o_ref.dtype)


def _choose_tile(B, block_b):
    """Rows per grid step: big tiles to amortize ~0.35us/step overhead, but
    at least 2 grid steps for large B so v7x's 2 TensorCores both engage."""
    Bp8 = _round_up(B, 8)
    if Bp8 <= 512:
        return Bp8                      # tiny batch: single step
    half = _round_up(-(-Bp8 // 2), 8)   # ceil(Bp8/2) rounded to sublane
    return min(block_b, half)


def agent_network_pallas(obs, message, fingerprint, pp, *, block_b=2048):
    """obs:(B,obs_dim) message:(B,comm_dim) fingerprint:(B,fp_dim); pp: prepared params."""
    B, obs_dim = obs.shape
    comm_dim = message.shape[1]
    fp_dim = fingerprint.shape[1]
    Hp = pp["w2"].shape[0]
    act_dim = pp["w3"].shape[1]

    tb = _choose_tile(B, block_b)
    Bp = _round_up(B, tb)

    def pad_batch(a):
        a = a.astype(jnp.float32)
        if Bp != B:
            a = jnp.pad(a, ((0, Bp - B), (0, 0)))
        return a

    obs_p = pad_batch(obs)
    msg_p = pad_batch(message)
    fp_p = pad_batch(fingerprint)

    batch_spec = lambda d: pl.BlockSpec((tb, d), lambda i: (i, 0))
    # Constant index_map -> weights/biases stay resident in VMEM across steps.
    const_spec = lambda a: pl.BlockSpec(a.shape, lambda i: (0, 0))

    compiler_kwargs = {"dimension_semantics": ("parallel",)}
    if tb > 4096:
        # ~tb * 2.5 KB live per step; raise scoped VMEM but stay under v7x's
        # 64 MiB physical cap.
        compiler_kwargs["vmem_limit_bytes"] = 60 << 20

    return pl.pallas_call(
        _mlp_kernel,
        out_shape=jax.ShapeDtypeStruct((Bp, act_dim), jnp.float32),
        grid=(Bp // tb,),
        in_specs=[
            batch_spec(obs_dim), batch_spec(comm_dim), batch_spec(fp_dim),
            const_spec(pp["w1_obs"]), const_spec(pp["w1_msg"]),
            const_spec(pp["w1_fp"]), const_spec(pp["b1"]),
            const_spec(pp["w2"]), const_spec(pp["b2"]),
            const_spec(pp["w3"]), const_spec(pp["b3"]),
        ],
        out_specs=pl.BlockSpec((tb, act_dim), lambda i: (i, 0)),
        compiler_params=pltpu.CompilerParams(**compiler_kwargs),
    )(obs_p, msg_p, fp_p,
      pp["w1_obs"], pp["w1_msg"], pp["w1_fp"], pp["b1"],
      pp["w2"], pp["b2"], pp["w3"], pp["b3"])


def agent_network_forward(pp, obs, message=None, fingerprint=None, *, block_b=2048):
    """Mirrors AgentNetwork.forward semantics (obs/message/fingerprint handling)."""
    obs = jnp.asarray(obs, jnp.float32)
    squeeze_output = obs.ndim == 1
    if squeeze_output:
        obs = obs[None, :]
    batch_size = obs.shape[0]

    def norm(v):
        if v is None:
            return jnp.zeros((batch_size, 1), jnp.float32)
        v = jnp.atleast_1d(jnp.asarray(v, jnp.float32))
        if v.ndim == 1:
            v = v[:, None]
        if v.shape[0] != batch_size:
            # Matches torch .expand(batch_size, -1): only valid from size-1 dim.
            v = jnp.broadcast_to(v, (batch_size, v.shape[1]))
        return v

    message = norm(message)
    fingerprint = norm(fingerprint)

    out_padded = agent_network_pallas(obs, message, fingerprint, pp, block_b=block_b)
    out = out_padded[:batch_size]
    if squeeze_output:
        out = out[0]
    return out


def init_params(key, obs_dim, act_dim, hidden_dim=64, comm_dim=1, fingerprint_dim=1):
    """PyTorch nn.Linear default init: U(-1/sqrt(fan_in), 1/sqrt(fan_in)).
    Weights stored as (in, out) = transpose of PyTorch's (out, in)."""
    input_dim = obs_dim + comm_dim + fingerprint_dim
    dims = [(input_dim, hidden_dim), (hidden_dim, hidden_dim), (hidden_dim, act_dim)]
    params = {}
    for i, (fan_in, fan_out) in enumerate(dims, start=1):
        key, kw, kb = jax.random.split(key, 3)
        bound = 1.0 / (fan_in ** 0.5)
        params[f"w{i}"] = jax.random.uniform(kw, (fan_in, fan_out), jnp.float32,
                                             minval=-bound, maxval=bound)
        params[f"b{i}"] = jax.random.uniform(kb, (1, fan_out), jnp.float32,
                                             minval=-bound, maxval=bound)
    return params


def prepare_params(params, obs_dim, comm_dim=1, fingerprint_dim=1, hidden_pad=_LANE):
    """Split w1 by input block (fuses the concat), zero-pad the hidden dim to
    128 lanes (mathematically a no-op), cast matmul weights to bf16.  The
    output/act dim is left UNPADDED (narrow lane-masked store, 32x less HBM
    writeback at act_dim=4)."""
    hidden_dim = params["w1"].shape[1]
    act_dim = params["w3"].shape[1]
    Hp = _round_up(hidden_dim, hidden_pad)

    def pad2(a, rows, cols):
        return jnp.pad(a, ((0, rows - a.shape[0]), (0, cols - a.shape[1])))

    w1p = pad2(params["w1"], params["w1"].shape[0], Hp)
    return {
        "w1_obs": w1p[:obs_dim].astype(jnp.bfloat16),
        "w1_msg": w1p[obs_dim:obs_dim + comm_dim].astype(jnp.bfloat16),
        "w1_fp": w1p[obs_dim + comm_dim:].astype(jnp.bfloat16),
        "b1": pad2(params["b1"], 1, Hp).astype(jnp.float32),
        "w2": pad2(params["w2"], Hp, Hp).astype(jnp.bfloat16),
        "b2": pad2(params["b2"], 1, Hp).astype(jnp.float32),
        "w3": pad2(params["w3"], Hp, act_dim).astype(jnp.bfloat16),   # row pad only
        "b3": params["b3"].astype(jnp.float32),
        "act_dim": act_dim,
        "hidden_dim": hidden_dim,
    }


if __name__ == "__main__":
    obs_dim, act_dim, hidden_dim = 16, 4, 64
    batch = 8

    key = jax.random.PRNGKey(0)
    key, k_params, k_obs, k_msg, k_fp = jax.random.split(key, 5)

    params = init_params(k_params, obs_dim, act_dim, hidden_dim)
    pp = prepare_params(params, obs_dim)

    obs = jax.random.normal(k_obs, (batch, obs_dim), jnp.float32)
    message = jax.random.normal(k_msg, (batch, 1), jnp.float32)
    fingerprint = jax.random.normal(k_fp, (batch, 1), jnp.float32)

    out = jax.block_until_ready(agent_network_forward(pp, obs, message, fingerprint))
    assert out.shape == (batch, act_dim)

    # Tight reference: mirrors the kernel's numerics (bf16 MXU operands, f32
    # accumulate, f32 rank-1 msg/fp path with bf16-rounded weights).
    bf = lambda a: a.astype(jnp.bfloat16)
    w1o = params["w1"][:obs_dim]
    w1m = params["w1"][obs_dim:obs_dim + 1]
    w1f = params["w1"][obs_dim + 1:]
    h1 = (jnp.dot(bf(obs), bf(w1o), preferred_element_type=jnp.float32)
          + message * bf(w1m).astype(jnp.float32)
          + fingerprint * bf(w1f).astype(jnp.float32)
          + params["b1"])
    h1 = jnp.maximum(h1, 0.0)
    h2 = jnp.maximum(jnp.dot(bf(h1), bf(params["w2"]),
                             preferred_element_type=jnp.float32) + params["b2"], 0.0)
    ref = jnp.dot(bf(h2), bf(params["w3"]),
                  preferred_element_type=jnp.float32) + params["b3"]
    assert jnp.allclose(out, ref, atol=2e-3, rtol=2e-3)

    # Full-f32 reference -> loose check (bf16 matmul operands lose a few bits).
    x = jnp.concatenate([obs, message, fingerprint], axis=-1)
    h1f = jnp.maximum(x @ params["w1"] + params["b1"], 0.0)
    h2f = jnp.maximum(h1f @ params["w2"] + params["b2"], 0.0)
    reff = h2f @ params["w3"] + params["b3"]
    assert jnp.allclose(out, reff, atol=5e-2, rtol=5e-2)

    # 1-D single-observation path (squeeze semantics, defaults for msg/fp).
    out1 = jax.block_until_ready(agent_network_forward(pp, obs[0]))
    assert out1.shape == (act_dim,)

    # Larger batch exercises the batch grid (>=2 grid steps, weights resident,
    # both v7x TensorCores engaged via the "parallel" batch axis).
    big_obs = jax.random.normal(key, (1024, obs_dim), jnp.float32)
    out_big = jax.block_until_ready(agent_network_forward(pp, big_obs))
    assert out_big.shape == (1024, act_dim)

    print("KERNEL_OK")
</pallas_src>

<mosaic_0001>
module attributes {stable_mosaic.version = 11 : i64} {
  func.func @_mlp_kernel(%arg0: i32, %arg1: memref<8x16xf32, #tpu.memory_space<vmem>>, %arg2: memref<8x1xf32, #tpu.memory_space<vmem>>, %arg3: memref<8x1xf32, #tpu.memory_space<vmem>>, %arg4: memref<16x128xbf16, #tpu.memory_space<vmem>>, %arg5: memref<1x128xbf16, #tpu.memory_space<vmem>>, %arg6: memref<1x128xbf16, #tpu.memory_space<vmem>>, %arg7: memref<1x128xf32, #tpu.memory_space<vmem>>, %arg8: memref<128x128xbf16, #tpu.memory_space<vmem>>, %arg9: memref<1x128xf32, #tpu.memory_space<vmem>>, %arg10: memref<128x4xbf16, #tpu.memory_space<vmem>>, %arg11: memref<1x4xf32, #tpu.memory_space<vmem>>, %arg12: memref<8x4xf32, #tpu.memory_space<vmem>>) attributes {dimension_semantics = [#tpu.dimension_semantics<parallel>], iteration_bounds = array<i64: 1>, scalar_prefetch = 0 : i64, scratch_operands = 0 : i64, tpu.core_type = #tpu.core_type<tc>, window_params = [{transform_indices = @transform_0, window_bounds = array<i64: 8, 16>}, {transform_indices = @transform_1, window_bounds = array<i64: 8, 1>}, {transform_indices = @transform_2, window_bounds = array<i64: 8, 1>}, {pipeline_mode = #tpu.pipeline_mode<synchronous>, transform_indices = @transform_3, window_bounds = array<i64: 16, 128>}, {pipeline_mode = #tpu.pipeline_mode<synchronous>, transform_indices = @transform_4, window_bounds = array<i64: 1, 128>}, {pipeline_mode = #tpu.pipeline_mode<synchronous>, transform_indices = @transform_5, window_bounds = array<i64: 1, 128>}, {pipeline_mode = #tpu.pipeline_mode<synchronous>, transform_indices = @transform_6, window_bounds = array<i64: 1, 128>}, {pipeline_mode = #tpu.pipeline_mode<synchronous>, transform_indices = @transform_7, window_bounds = array<i64: 128, 128>}, {pipeline_mode = #tpu.pipeline_mode<synchronous>, transform_indices = @transform_8, window_bounds = array<i64: 1, 128>}, {pipeline_mode = #tpu.pipeline_mode<synchronous>, transform_indices = @transform_9, window_bounds = array<i64: 128, 4>}, {pipeline_mode = #tpu.pipeline_mode<synchronous>, transform_indices = @transform_10, window_bounds = array<i64: 1, 4>}, {transform_indices = @transform_11, window_bounds = array<i64: 8, 4>}]} {
    %c0 = arith.constant 0 : index
    %c0_0 = arith.constant 0 : index
    %0 = vector.load %arg1[%c0, %c0_0] : memref<8x16xf32, #tpu.memory_space<vmem>>, vector<8x16xf32>
    %1 = arith.truncf %0 : vector<8x16xf32> to vector<8x16xbf16>
    %c0_1 = arith.constant 0 : index
    %c0_2 = arith.constant 0 : index
    %2 = vector.load %arg4[%c0_1, %c0_2] : memref<16x128xbf16, #tpu.memory_space<vmem>>, vector<16x128xbf16>
    %cst = arith.constant dense<0.000000e+00> : vector<8x128xf32>
    %3 = tpu.matmul %1, %2, %cst {dimension_numbers = #tpu.dot_dimension_numbers<[1], [0], [0], [1], [0, 0, 1, 1], [], []>} : vector<8x16xbf16>, vector<16x128xbf16>, vector<8x128xf32> -> vector<8x128xf32>
    %c0_3 = arith.constant 0 : index
    %c0_4 = arith.constant 0 : index
    %4 = vector.load %arg2[%c0_3, %c0_4] : memref<8x1xf32, #tpu.memory_space<vmem>>, vector<8x1xf32>
    %c0_5 = arith.constant 0 : index
    %c0_6 = arith.constant 0 : index
    %5 = vector.load %arg5[%c0_5, %c0_6] : memref<1x128xbf16, #tpu.memory_space<vmem>>, vector<1x128xbf16>
    %6 = arith.extf %5 : vector<1x128xbf16> to vector<1x128xf32>
    %7 = vector.broadcast %4 : vector<8x1xf32> to vector<8x128xf32>
    %8 = vector.broadcast %6 : vector<1x128xf32> to vector<8x128xf32>
    %9 = arith.mulf %7, %8 : vector<8x128xf32>
    %10 = arith.addf %3, %9 : vector<8x128xf32>
    %c0_7 = arith.constant 0 : index
    %c0_8 = arith.constant 0 : index
    %11 = vector.load %arg3[%c0_7, %c0_8] : memref<8x1xf32, #tpu.memory_space<vmem>>, vector<8x1xf32>
    %c0_9 = arith.constant 0 : index
    %c0_10 = arith.constant 0 : index
    %12 = vector.load %arg6[%c0_9, %c0_10] : memref<1x128xbf16, #tpu.memory_space<vmem>>, vector<1x128xbf16>
    %13 = arith.extf %12 : vector<1x128xbf16> to vector<1x128xf32>
    %14 = vector.broadcast %11 : vector<8x1xf32> to vector<8x128xf32>
    %15 = vector.broadcast %13 : vector<1x128xf32> to vector<8x128xf32>
    %16 = arith.mulf %14, %15 : vector<8x128xf32>
    %17 = arith.addf %10, %16 : vector<8x128xf32>
    %c0_11 = arith.constant 0 : index
    %c0_12 = arith.constant 0 : index
    %18 = vector.load %arg7[%c0_11, %c0_12] : memref<1x128xf32, #tpu.memory_space<vmem>>, vector<1x128xf32>
    %19 = vector.broadcast %18 : vector<1x128xf32> to vector<8x128xf32>
    %20 = arith.addf %17, %19 : vector<8x128xf32>
    %cst_13 = arith.constant 0.000000e+00 : f32
    %21 = vector.broadcast %cst_13 : f32 to vector<8x128xf32>
    %22 = arith.maximumf %20, %21 : vector<8x128xf32>
    %23 = arith.truncf %22 : vector<8x128xf32> to vector<8x128xbf16>
    %c0_14 = arith.constant 0 : index
    %c0_15 = arith.constant 0 : index
    %24 = vector.load %arg8[%c0_14, %c0_15] : memref<128x128xbf16, #tpu.memory_space<vmem>>, vector<128x128xbf16>
    %cst_16 = arith.constant dense<0.000000e+00> : vector<8x128xf32>
    %25 = tpu.matmul %23, %24, %cst_16 {dimension_numbers = #tpu.dot_dimension_numbers<[1], [0], [0], [1], [0, 0, 1, 1], [], []>} : vector<8x128xbf16>, vector<128x128xbf16>, vector<8x128xf32> -> vector<8x128xf32>
    %c0_17 = arith.constant 0 : index
    %c0_18 = arith.constant 0 : index
    %26 = vector.load %arg9[%c0_17, %c0_18] : memref<1x128xf32, #tpu.memory_space<vmem>>, vector<1x128xf32>
    %27 = vector.broadcast %26 : vector<1x128xf32> to vector<8x128xf32>
    %28 = arith.addf %25, %27 : vector<8x128xf32>
    %cst_19 = arith.constant 0.000000e+00 : f32
    %29 = vector.broadcast %cst_19 : f32 to vector<8x128xf32>
    %30 = arith.maximumf %28, %29 : vector<8x128xf32>
    %31 = arith.truncf %30 : vector<8x128xf32> to vector<8x128xbf16>
    %c0_20 = arith.constant 0 : index
    %c0_21 = arith.constant 0 : index
    %32 = vector.load %arg10[%c0_20, %c0_21] : memref<128x4xbf16, #tpu.memory_space<vmem>>, vector<128x4xbf16>
    %cst_22 = arith.constant dense<0.000000e+00> : vector<8x4xf32>
    %33 = tpu.matmul %31, %32, %cst_22 {dimension_numbers = #tpu.dot_dimension_numbers<[1], [0], [0], [1], [0, 0, 1, 1], [], []>} : vector<8x128xbf16>, vector<128x4xbf16>, vector<8x4xf32> -> vector<8x4xf32>
    %c0_23 = arith.constant 0 : index
    %c0_24 = arith.constant 0 : index
    %34 = vector.load %arg11[%c0_23, %c0_24] : memref<1x4xf32, #tpu.memory_space<vmem>>, vector<1x4xf32>
    %35 = vector.broadcast %34 : vector<1x4xf32> to vector<8x4xf32>
    %36 = arith.addf %33, %35 : vector<8x4xf32>
    %c0_25 = arith.constant 0 : index
    %c0_26 = arith.constant 0 : index
    %37 = vector.load %arg12[%c0_25, %c0_26] : memref<8x4xf32, #tpu.memory_space<vmem>>, vector<8x4xf32>
    tpu.vector_store %arg12[%c0_25, %c0_26], %36 {strides = array<i32>} : memref<8x4xf32, #tpu.memory_space<vmem>>, vector<8x4xf32>,
    return
  }
  func.func @transform_0(%arg0: i32) -> (i32, i32) {
    %c0_i32 = arith.constant 0 : i32
    %c0_i32_0 = arith.constant 0 : i32
    return %arg0, %c0_i32 : i32, i32
  }
  func.func @transform_1(%arg0: i32) -> (i32, i32) {
    %c0_i32 = arith.constant 0 : i32
    %c0_i32_0 = arith.constant 0 : i32
    return %arg0, %c0_i32 : i32, i32
  }
  func.func @transform_2(%arg0: i32) -> (i32, i32) {
    %c0_i32 = arith.constant 0 : i32
    %c0_i32_0 = arith.constant 0 : i32
    return %arg0, %c0_i32 : i32, i32
  }
  func.func @transform_3(%arg0: i32) -> (i32, i32) {
    %c0_i32 = arith.constant 0 : i32
    %c0_i32_0 = arith.constant 0 : i32
    %c0_i32_1 = arith.constant 0 : i32
    return %c0_i32, %c0_i32_0 : i32, i32
  }
  func.func @transform_4(%arg0: i32) -> (i32, i32) {
    %c0_i32 = arith.constant 0 : i32
    %c0_i32_0 = arith.constant 0 : i32
    %c0_i32_1 = arith.constant 0 : i32
    return %c0_i32, %c0_i32_0 : i32, i32
  }
  func.func @transform_5(%arg0: i32) -> (i32, i32) {
    %c0_i32 = arith.constant 0 : i32
    %c0_i32_0 = arith.constant 0 : i32
    %c0_i32_1 = arith.constant 0 : i32
    return %c0_i32, %c0_i32_0 : i32, i32
  }
  func.func @transform_6(%arg0: i32) -> (i32, i32) {
    %c0_i32 = arith.constant 0 : i32
    %c0_i32_0 = arith.constant 0 : i32
    %c0_i32_1 = arith.constant 0 : i32
    return %c0_i32, %c0_i32_0 : i32, i32
  }
  func.func @transform_7(%arg0: i32) -> (i32, i32) {
    %c0_i32 = arith.constant 0 : i32
    %c0_i32_0 = arith.constant 0 : i32
    %c0_i32_1 = arith.constant 0 : i32
    return %c0_i32, %c0_i32_0 : i32, i32
  }
  func.func @transform_8(%arg0: i32) -> (i32, i32) {
    %c0_i32 = arith.constant 0 : i32
    %c0_i32_0 = arith.constant 0 : i32
    %c0_i32_1 = arith.constant 0 : i32
    return %c0_i32, %c0_i32_0 : i32, i32
  }
  func.func @transform_9(%arg0: i32) -> (i32, i32) {
    %c0_i32 = arith.constant 0 : i32
    %c0_i32_0 = arith.constant 0 : i32
    %c0_i32_1 = arith.constant 0 : i32
    return %c0_i32, %c0_i32_0 : i32, i32
  }
  func.func @transform_10(%arg0: i32) -> (i32, i32) {
    %c0_i32 = arith.constant 0 : i32
    %c0_i32_0 = arith.constant 0 : i32
    %c0_i32_1 = arith.constant 0 : i32
    return %c0_i32, %c0_i32_0 : i32, i32
  }
  func.func @transform_11(%arg0: i32) -> (i32, i32) {
    %c0_i32 = arith.constant 0 : i32
    %c0_i32_0 = arith.constant 0 : i32
    return %arg0, %c0_i32 : i32, i32
  }
}

</mosaic_0001>

<llo_original>
// kernel: tpu_custom_call.1
$region0: #{tpu_custom_call.1}
  #allocation0 [shape = 'u32[]', space=smem, size = 0x4, offset = 0x4, fixed_abs, tag = 'smem constant byte address 0x4 - core index']
  #allocation1 [shape = 'u32[144,128]{1,0:T(1,128)}', space=vmem, size = 0x12000, scoped, tag = 'internal scratch']
  %s0 = inlined_call_operand.vmem [shape: f32[8,16], index: 0, kind: input, shape index: {}]
  %s1 = inlined_call_operand.vmem [shape: f32[8,1], index: 1, kind: input, shape index: {}]
  %s2 = inlined_call_operand.vmem [shape: f32[8,1], index: 2, kind: input, shape index: {}]
  %s3 = inlined_call_operand.vmem [shape: bf16[16,128], index: 3, kind: input, shape index: {}]
  %s4 = inlined_call_operand.vmem [shape: bf16[1,128], index: 4, kind: input, shape index: {}]
  %s5 = inlined_call_operand.vmem [shape: bf16[1,128], index: 5, kind: input, shape index: {}]
  %s6 = inlined_call_operand.vmem [shape: f32[1,128], index: 6, kind: input, shape index: {}]
  %s7 = inlined_call_operand.vmem [shape: bf16[128,128], index: 7, kind: input, shape index: {}]
  %s8 = inlined_call_operand.vmem [shape: f32[1,128], index: 8, kind: input, shape index: {}]
  %s9 = inlined_call_operand.vmem [shape: bf16[128,4], index: 9, kind: input, shape index: {}]
  %s10 = inlined_call_operand.vmem [shape: f32[1,4], index: 10, kind: input, shape index: {}]
  %s11 = inlined_call_operand.vmem [shape: f32[8,4], index: 11, kind: output, shape index: {}]
  %s12 = sld [smem:[#allocation0]]
  $region54: #{tpu_custom_call.1} parent=0
    _
  %s14 = ssub.s32 1, %s12
  %s15 = scalar_select 0, %s14, %s12
  // Predicated region
  $region2: #{tpu_custom_call.1} parent=0 // pred_check
    _
  $region3: #{tpu_custom_call.1} parent=0 // pred_check_branch
    %17 = sbr.rel (0) target = $region5
  $region4: #{tpu_custom_call.1} parent=0 // pred_region
    _
  $region5: #{tpu_custom_call.1} parent=0 // pred_fallthru
    _
  // Predicated region
  $region6: #{tpu_custom_call.1} parent=0 // pred_check
    _
  $region7: #{tpu_custom_call.1} parent=0 // pred_check_branch
    %19 = sbr.rel (0) target = $region9
  $region8: #{tpu_custom_call.1} parent=0 // pred_region
    _
  $region9: #{tpu_custom_call.1} parent=0 // pred_fallthru
    _
  // Predicated region
  $region10: #{tpu_custom_call.1} parent=0 // pred_check
    _
  $region11: #{tpu_custom_call.1} parent=0 // pred_check_branch
    %21 = sbr.rel (0) target = $region13
  $region12: #{tpu_custom_call.1} parent=0 // pred_region
    _
  $region13: #{tpu_custom_call.1} parent=0 // pred_fallthru
    _
  // Predicated region
  $region14: #{tpu_custom_call.1} parent=0 // pred_check
    _
  $region15: #{tpu_custom_call.1} parent=0 // pred_check_branch
    %23 = sbr.rel (0) target = $region17
  $region16: #{tpu_custom_call.1} parent=0 // pred_region
    _
  $region17: #{tpu_custom_call.1} parent=0 // pred_fallthru
    _
  // Predicated region
  $region18: #{tpu_custom_call.1} parent=0 // pred_check
    _
  $region19: #{tpu_custom_call.1} parent=0 // pred_check_branch
    %25 = sbr.rel (0) target = $region21
  $region20: #{tpu_custom_call.1} parent=0 // pred_region
    _
  $region21: #{tpu_custom_call.1} parent=0 // pred_fallthru
    _
  // Predicated region
  $region22: #{tpu_custom_call.1} parent=0 // pred_check
    _
  $region23: #{tpu_custom_call.1} parent=0 // pred_check_branch
    %27 = sbr.rel (0) target = $region25
  $region24: #{tpu_custom_call.1} parent=0 // pred_region
    _
  $region25: #{tpu_custom_call.1} parent=0 // pred_fallthru
    _
  // Predicated region
  $region26: #{tpu_custom_call.1} parent=0 // pred_check
    _
  $region27: #{tpu_custom_call.1} parent=0 // pred_check_branch
    %29 = sbr.rel (0) target = $region29
  $region28: #{tpu_custom_call.1} parent=0 // pred_region
    _
  $region29: #{tpu_custom_call.1} parent=0 // pred_fallthru
    _
  // Predicated region
  $region30: #{tpu_custom_call.1} parent=0 // pred_check
    _
  $region31: #{tpu_custom_call.1} parent=0 // pred_check_branch
    %31 = sbr.rel (0) target = $region33
  $region32: #{tpu_custom_call.1} parent=0 // pred_region
    _
  $region33: #{tpu_custom_call.1} parent=0 // pred_fallthru
    _
  // Predicated region
  $region34: #{tpu_custom_call.1} parent=0 // pred_check
    _
  $region35: #{tpu_custom_call.1} parent=0 // pred_check_branch
    %33 = sbr.rel (0) target = $region37
  $region36: #{tpu_custom_call.1} parent=0 // pred_region
    _
  $region37: #{tpu_custom_call.1} parent=0 // pred_fallthru
    _
  // Predicated region
  $region38: #{tpu_custom_call.1} parent=0 // pred_check
    _
  $region39: #{tpu_custom_call.1} parent=0 // pred_check_branch
    %35 = sbr.rel (0) target = $region41
  $region40: #{tpu_custom_call.1} parent=0 // pred_region
    _
  $region41: #{tpu_custom_call.1} parent=0 // pred_fallthru
    _
  // Predicated region
  $region42: #{tpu_custom_call.1} parent=0 // pred_check
    _
  $region43: #{tpu_custom_call.1} parent=0 // pred_check_branch
    %37 = sbr.rel (0) target = $region45
  $region44: #{tpu_custom_call.1} parent=0 // pred_region
    _
  $region45: #{tpu_custom_call.1} parent=0 // pred_fallthru
    _
  %v39 = vld [vmem:[%s0] sm:$0xff]
  %v40 = vpack.c.bf16 %v39, %v39
  %v41 = vld [vmem:[%s3] sm:$0xf]
  %v42 = vld [vmem:[%s3 + $0x4] sm:$0xf]
  %v43 = vld [vmem:[%s1] sm:$0xff]
  %v44 = vld [vmem:[%s4] sm:$0x1]
  %v45 = vunpack.c.l.bf16 %v44
  %47 = vset.pattern.permute.xlu0 0
  %48 = vperm.xlu0 %47, %v43
  %v49 = vpop.permute.xlu0 %48
  %v51 = vlaneseq
  %v52 = vshrl.u32 %v51, 7
  %v53 = vsub.s32 0, %v52
  %v54 = vrot.slane %v45, %v53
  %v55 = vmul.f32 %v49, %v54
  %v58 = vunpack.c.l.b16 %v41
  %v59 = vunpack.c.l.b16 %v42
  %v60 = vpack.c.b16 %v59, %v58
  %vm62 = vcmask 130048
  %v64 = vsel %vm62, %v40, 0
  %66 = vmatprep.subr.bf16.mxu0 0
  %67 = vmatpush1.bf16.msra.mxu0 0
  %68 = vmatprep.subr.bf16.mxu0 0
  %69 = vmatpush1.bf16.msra.mxu0 0
  %70 = vmatprep.subr.bf16.mxu0 0
  %71 = vmatpush1.bf16.msra.mxu0 0
  %72 = vmatprep.subr.bf16.mxu0 0
  %73 = vmatpush1.bf16.msra.mxu0 0
  %74 = vmatprep.subr.bf16.mxu0 0
  %75 = vmatpush1.bf16.msra.mxu0 0
  %76 = vmatprep.subr.bf16.mxu0 0
  %77 = vmatpush1.bf16.msra.mxu0 0
  %78 = vmatprep.subr.bf16.mxu0 0
  %79 = vmatpush1.bf16.msra.mxu0 0
  %80 = vmatprep.subr.bf16.mxu0 0
  %81 = vmatpush1.bf16.msra.mxu0 %v60
  %82 = vmatprep.subr.bf16.mxu0 0
  %83 = vmatpush2.bf16.msra.mxu0 0
  %84 = vmatprep.subr.bf16.mxu0 0
  %85 = vmatpush2.bf16.msra.mxu0 0
  %86 = vmatprep.subr.bf16.mxu0 0
  %87 = vmatpush2.bf16.msra.mxu0 0
  %88 = vmatprep.subr.bf16.mxu0 0
  %89 = vmatpush2.bf16.msra.mxu0 0
  %90 = vmatprep.subr.bf16.mxu0 0
  %91 = vmatpush2.bf16.msra.mxu0 0
  %92 = vmatprep.subr.bf16.mxu0 0
  %93 = vmatpush2.bf16.msra.mxu0 0
  %94 = vmatprep.subr.bf16.mxu0 0
  %95 = vmatpush2.bf16.msra.mxu0 0
  %96 = vmatprep.subr.bf16.mxu0 0
  %97 = vmatpush2.bf16.msra.mxu0 0
  %98 = vmatprep.mubr.bf16.mxu0 0
  %99 = vmatmul.mubr.bf16.gmra.mxu0 %v64
  %v100 = vpop.f32.mrf.mxu0
  %v101 = vadd.f32 %v55, %v100
  %v102 = vpop.f32.mrf.mxu0
  %v103 = vpop.f32.mrf.mxu0
  %v104 = vpop.f32.mrf.mxu0
  %105 = vdwg.mxu0
  %v106 = vld [vmem:[%s2] sm:$0xff]
  %v107 = vld [vmem:[%s5] sm:$0x1]
  %v108 = vunpack.c.l.bf16 %v107
  %110 = vset.pattern.permute.xlu0 0
  %111 = vperm.xlu0 %110, %v106
  %v112 = vpop.permute.xlu0 %111
  %v114 = vlaneseq
  %v115 = vshrl.u32 %v114, 7
  %v116 = vsub.s32 0, %v115
  %v117 = vrot.slane %v108, %v116
  %v118 = vmul.f32 %v112, %v117
  %v119 = vadd.f32 %v101, %v118
  %v120 = vld [vmem:[%s6] sm:$0x1]
  %v122 = vlaneseq
  %v123 = vshrl.u32 %v122, 7
  %v124 = vsub.s32 0, %v123
  %v125 = vrot.slane %v120, %v124
  %v127 = vadd.f32 %v119, %v125
  %v128 = vmax.f32 %v127, 0.0
  %v129 = vpack.c.bf16 %v128, %v128
  %v130 = vld [vmem:[%s7] sm:$0xf]
  %v131 = vld [vmem:[%s7 + $0x4] sm:$0xf]
  %v132 = vld [vmem:[%s7 + $0x8] sm:$0xf]
  %v133 = vld [vmem:[%s7 + $0xc] sm:$0xf]
  %v134 = vld [vmem:[%s7 + $0x10] sm:$0xf]
  %v135 = vld [vmem:[%s7 + $0x14] sm:$0xf]
  %v136 = vld [vmem:[%s7 + $0x18] sm:$0xf]
  %v137 = vld [vmem:[%s7 + $0x1c] sm:$0xf]
  %v138 = vld [vmem:[%s7 + $0x20] sm:$0xf]
  %v139 = vld [vmem:[%s7 + $0x24] sm:$0xf]
  %v140 = vld [vmem:[%s7 + $0x28] sm:$0xf]
  %v141 = vld [vmem:[%s7 + $0x2c] sm:$0xf]
  %v142 = vld [vmem:[%s7 + $0x30] sm:$0xf]
  %v143 = vld [vmem:[%s7 + $0x34] sm:$0xf]
  %v144 = vld [vmem:[%s7 + $0x38] sm:$0xf]
  %v145 = vld [vmem:[%s7 + $0x3c] sm:$0xf]
  %v146 = vld [vmem:[%s8] sm:$0x1]
  %v148 = vlaneseq
  %v149 = vshrl.u32 %v148, 7
  %v150 = vsub.s32 0, %v149
  %v151 = vrot.slane %v146, %v150
  %v169 = vunpack.c.l.b16 %v130
  %v170 = vunpack.c.l.b16 %v131
  %v171 = vunpack.c.l.b16 %v132
  %v172 = vunpack.c.l.b16 %v133
  %v173 = vunpack.c.l.b16 %v134
  %v174 = vunpack.c.l.b16 %v135
  %v175 = vunpack.c.l.b16 %v136
  %v176 = vunpack.c.l.b16 %v137
  %v177 = vunpack.c.l.b16 %v138
  %v178 = vunpack.c.l.b16 %v139
  %v179 = vunpack.c.l.b16 %v140
  %v180 = vunpack.c.l.b16 %v141
  %v181 = vunpack.c.l.b16 %v142
  %v182 = vunpack.c.l.b16 %v143
  %v183 = vunpack.c.l.b16 %v144
  %v184 = vunpack.c.l.b16 %v145
  %v185 = vpack.c.b16 %v170, %v169
  %v186 = vpack.c.b16 %v172, %v171
  %v187 = vpack.c.b16 %v174, %v173
  %v188 = vpack.c.b16 %v176, %v175
  %v189 = vpack.c.b16 %v178, %v177
  %v190 = vpack.c.b16 %v180, %v179
  %v191 = vpack.c.b16 %v182, %v181
  %v192 = vpack.c.b16 %v184, %v183
  %201 = vmatprep.subr.bf16.mxu0 0
  %202 = vmatpush1.bf16.msra.mxu0 %v192
  %203 = vmatprep.subr.bf16.mxu0 0
  %204 = vmatpush1.bf16.msra.mxu0 %v191
  %205 = vmatprep.subr.bf16.mxu0 0
  %206 = vmatpush1.bf16.msra.mxu0 %v190
  %207 = vmatprep.subr.bf16.mxu0 0
  %208 = vmatpush1.bf16.msra.mxu0 %v189
  %209 = vmatprep.subr.bf16.mxu0 0
  %210 = vmatpush1.bf16.msra.mxu0 %v188
  %211 = vmatprep.subr.bf16.mxu0 0
  %212 = vmatpush1.bf16.msra.mxu0 %v187
  %213 = vmatprep.subr.bf16.mxu0 0
  %214 = vmatpush1.bf16.msra.mxu0 %v186
  %215 = vmatprep.subr.bf16.mxu0 0
  %216 = vmatpush1.bf16.msra.mxu0 %v185
  %217 = vmatprep.subr.bf16.mxu0 0
  %218 = vmatpush2.bf16.msra.mxu0 0
  %219 = vmatprep.subr.bf16.mxu0 0
  %220 = vmatpush2.bf16.msra.mxu0 0
  %221 = vmatprep.subr.bf16.mxu0 0
  %222 = vmatpush2.bf16.msra.mxu0 0
  %223 = vmatprep.subr.bf16.mxu0 0
  %224 = vmatpush2.bf16.msra.mxu0 0
  %225 = vmatprep.subr.bf16.mxu0 0
  %226 = vmatpush2.bf16.msra.mxu0 0
  %227 = vmatprep.subr.bf16.mxu0 0
  %228 = vmatpush2.bf16.msra.mxu0 0
  %229 = vmatprep.subr.bf16.mxu0 0
  %230 = vmatpush2.bf16.msra.mxu0 0
  %231 = vmatprep.subr.bf16.mxu0 0
  %232 = vmatpush2.bf16.msra.mxu0 0
  %233 = vmatprep.mubr.bf16.mxu0 0
  %234 = vmatmul.mubr.bf16.gmra.mxu0 %v129
  %v235 = vpop.f32.mrf.mxu0
  %v236 = vadd.f32 %v151, %v235
  %v237 = vpop.f32.mrf.mxu0
  %v238 = vpop.f32.mrf.mxu0
  %v239 = vpop.f32.mrf.mxu0
  %240 = vdwg.mxu0
  %v241 = vmax.f32 %v236, 0.0
  %v242 = vpack.c.bf16 %v241, %v241
  %v243 = vld [vmem:[%s9] sm:$0xf]
  %v244 = vld [vmem:[%s9 + $0x4] sm:$0xf]
  %v245 = vld [vmem:[%s9 + $0x8] sm:$0xf]
  %v246 = vld [vmem:[%s9 + $0xc] sm:$0xf]
  %v247 = vld [vmem:[%s9 + $0x10] sm:$0xf]
  %v248 = vld [vmem:[%s9 + $0x14] sm:$0xf]
  %v249 = vld [vmem:[%s9 + $0x18] sm:$0xf]
  %v250 = vld [vmem:[%s9 + $0x1c] sm:$0xf]
  %v251 = vld [vmem:[%s9 + $0x20] sm:$0xf]
  %v252 = vld [vmem:[%s9 + $0x24] sm:$0xf]
  %v253 = vld [vmem:[%s9 + $0x28] sm:$0xf]
  %v254 = vld [vmem:[%s9 + $0x2c] sm:$0xf]
  %v255 = vld [vmem:[%s9 + $0x30] sm:$0xf]
  %v256 = vld [vmem:[%s9 + $0x34] sm:$0xf]
  %v257 = vld [vmem:[%s9 + $0x38] sm:$0xf]
  %v258 = vld [vmem:[%s9 + $0x3c] sm:$0xf]
  %v259 = vld [vmem:[%s10] sm:$0x1]
  %v261 = vlaneseq
  %v262 = vshrl.u32 %v261, 7
  %v263 = vsub.s32 0, %v262
  %v264 = vrot.slane %v259, %v263
  %v282 = vunpack.c.l.b16 %v243
  %v283 = vunpack.c.l.b16 %v244
  %v284 = vunpack.c.l.b16 %v245
  %v285 = vunpack.c.l.b16 %v246
  %v286 = vunpack.c.l.b16 %v247
  %v287 = vunpack.c.l.b16 %v248
  %v288 = vunpack.c.l.b16 %v249
  %v289 = vunpack.c.l.b16 %v250
  %v290 = vunpack.c.l.b16 %v251
  %v291 = vunpack.c.l.b16 %v252
  %v292 = vunpack.c.l.b16 %v253
  %v293 = vunpack.c.l.b16 %v254
  %v294 = vunpack.c.l.b16 %v255
  %v295 = vunpack.c.l.b16 %v256
  %v296 = vunpack.c.l.b16 %v257
  %v297 = vunpack.c.l.b16 %v258
  %v298 = vpack.c.b16 %v283, %v282
  %v299 = vpack.c.b16 %v285, %v284
  %v300 = vpack.c.b16 %v287, %v286
  %v301 = vpack.c.b16 %v289, %v288
  %v302 = vpack.c.b16 %v291, %v290
  %v303 = vpack.c.b16 %v293, %v292
  %v304 = vpack.c.b16 %v295, %v294
  %v305 = vpack.c.b16 %v297, %v296
  %314 = vmatprep.subr.bf16.mxu0 0
  %315 = vmatpush1.bf16.msra.mxu0 %v305
  %316 = vmatprep.subr.bf16.mxu0 0
  %317 = vmatpush1.bf16.msra.mxu0 %v304
  %318 = vmatprep.subr.bf16.mxu0 0
  %319 = vmatpush1.bf16.msra.mxu0 %v303
  %320 = vmatprep.subr.bf16.mxu0 0
  %321 = vmatpush1.bf16.msra.mxu0 %v302
  %322 = vmatprep.subr.bf16.mxu0 0
  %323 = vmatpush1.bf16.msra.mxu0 %v301
  %324 = vmatprep.subr.bf16.mxu0 0
  %325 = vmatpush1.bf16.msra.mxu0 %v300
  %326 = vmatprep.subr.bf16.mxu0 0
  %327 = vmatpush1.bf16.msra.mxu0 %v299
  %328 = vmatprep.subr.bf16.mxu0 0
  %329 = vmatpush1.bf16.msra.mxu0 %v298
  %330 = vmatprep.subr.bf16.mxu0 0
  %331 = vmatpush2.bf16.msra.mxu0 0
  %332 = vmatprep.subr.bf16.mxu0 0
  %333 = vmatpush2.bf16.msra.mxu0 0
  %334 = vmatprep.subr.bf16.mxu0 0
  %335 = vmatpush2.bf16.msra.mxu0 0
  %336 = vmatprep.subr.bf16.mxu0 0
  %337 = vmatpush2.bf16.msra.mxu0 0
  %338 = vmatprep.subr.bf16.mxu0 0
  %339 = vmatpush2.bf16.msra.mxu0 0
  %340 = vmatprep.subr.bf16.mxu0 0
  %341 = vmatpush2.bf16.msra.mxu0 0
  %342 = vmatprep.subr.bf16.mxu0 0
  %343 = vmatpush2.bf16.msra.mxu0 0
  %344 = vmatprep.subr.bf16.mxu0 0
  %345 = vmatpush2.bf16.msra.mxu0 0
  %346 = vmatprep.mubr.bf16.mxu0 0
  %347 = vmatmul.mubr.bf16.gmra.mxu0 %v242
  %v348 = vpop.f32.mrf.mxu0
  %v349 = vadd.f32 %v264, %v348
  %v350 = vpop.f32.mrf.mxu0
  %v351 = vpop.f32.mrf.mxu0
  %v352 = vpop.f32.mrf.mxu0
  %353 = vdwg.mxu0
  %vm354 = vcmask 31744
  %355 = vst.msk [vmem:[%s11] sm:$0xff] %vm354, %v349
  // Predicated region
  $region46: #{tpu_custom_call.1} parent=0 // pred_check
    _
  $region47: #{tpu_custom_call.1} parent=0 // pred_check_branch
    %357 = sbr.rel (0) target = $region49
  $region48: #{tpu_custom_call.1} parent=0 // pred_region
    _
  $region49: #{tpu_custom_call.1} parent=0 // pred_fallthru
    _
  // Predicated region
  $region50: #{tpu_custom_call.1} parent=0 // pred_check
    _
  $region51: #{tpu_custom_call.1} parent=0 // pred_check_branch
    %359 = sbr.rel (0) target = $region53
  $region52: #{tpu_custom_call.1} parent=0 // pred_region
    _
  $region53: #{tpu_custom_call.1} parent=0 // pred_fallthru
    _

</llo_original>
